<compile_context>
chip_gen: v5e
topology: v5e:2x2
jax: 0.10.0
libtpu: 0.0.40
codegen_flags: <defaults>
</compile_context>

<pallas_src>
import functools

import jax
import jax.numpy as jnp
from jax import lax
from jax.experimental import pallas as pl
from jax.experimental.pallas import tpu as pltpu


def _mlp_kernel(y_ref, xt_ref, w_ref, b_ref, o_ref, *, L, H):
    """Fused  out = [y | xt_flat] @ W.T + b  in a single VMEM tile.

    y_ref  : (B, L)           activations (first chunk of `combined`)
    xt_ref : (B, 2*(L+H))     activations (second chunk of `combined`)
    w_ref  : (H, D)           PyTorch-layout weight (no transpose done outside)
    b_ref  : (1, H)           bias
    o_ref  : (B, H_pad)       lane-dense output slab, valid columns [0, H)
    """
    y = y_ref[...]                      # (B, L)
    xt = xt_ref[...]                    # (B, 2*(L+H))
    w = w_ref[...]                      # (H, D)
    wy = w[:, :L]                       # (H, L)       static lane slice
    wxt = w[:, L:]                      # (H, 2*(L+H)) static lane slice

    # Contract the last dim of both operands (i.e. x @ W.T) -- MXU handles the
    # transposed-RHS form natively, so no data movement for the transpose.
    dn = (((1,), (1,)), ((), ()))
    acc = lax.dot_general(y, wy, dn, preferred_element_type=jnp.float32)
    acc = acc + lax.dot_general(xt, wxt, dn, preferred_element_type=jnp.float32)
    acc = acc + b_ref[...]              # (1, H) broadcast over batch, f32 epilogue

    # Lane-dense unmasked store: pad the H valid columns out to o_ref's width.
    pad = o_ref.shape[-1] - H
    o_ref[...] = jnp.pad(acc, ((0, 0), (0, pad))).astype(o_ref.dtype)


def mlp_forward(y, xw, xt, weight, bias):
    """y: (B, L), xw: unused, xt: (B, L+H, 2), weight: (H, D), bias: (H,).

    Returns (B, H, 1), matching the PyTorch module.
    """
    del xw  # accepted but unused in the reference forward
    B, L = y.shape
    H, D = weight.shape

    xt_flat = xt.reshape(B, -1)         # contiguous reshape: no data movement
    assert L + xt_flat.shape[-1] == D, "weight in_features must equal L + 2*(L+H)"

    b2 = bias.reshape(1, H)

    # Round the output lane width up to a multiple of 128 so the kernel's store
    # is a full-lane unmasked vst; slice the valid columns in the wrapper.
    H_pad = pl.cdiv(H, 128) * 128

    out_pad = pl.pallas_call(
        functools.partial(_mlp_kernel, L=L, H=H),
        out_shape=jax.ShapeDtypeStruct((B, H_pad), y.dtype),
        in_specs=[
            pl.BlockSpec(memory_space=pltpu.MemorySpace.VMEM),  # y
            pl.BlockSpec(memory_space=pltpu.MemorySpace.VMEM),  # xt_flat
            pl.BlockSpec(memory_space=pltpu.MemorySpace.VMEM),  # weight (H, D)
            pl.BlockSpec(memory_space=pltpu.MemorySpace.VMEM),  # bias (1, H)
        ],
        out_specs=pl.BlockSpec(memory_space=pltpu.MemorySpace.VMEM),
    )(y, xt_flat, weight, b2)

    out = lax.slice(out_pad, (0, 0), (B, H)) if H_pad != H else out_pad
    return out[..., None]  # (B, H, 1)


if __name__ == "__main__":
    # Small shapes consistent with the module: args.L = 8, args.H = 8.
    L, H, B = 8, 8, 4
    D = L + (L + H) * 2  # 40

    key = jax.random.PRNGKey(0)
    k_y, k_xw, k_xt, k_w, k_b = jax.random.split(key, 5)

    y = jax.random.normal(k_y, (B, L), dtype=jnp.float32)
    xw = jax.random.normal(k_xw, (B, L + H, 2), dtype=jnp.float32)  # unused
    xt = jax.random.normal(k_xt, (B, L + H, 2), dtype=jnp.float32)

    # Deterministic Linear init (PyTorch-style uniform in +/- 1/sqrt(D)).
    bound = 1.0 / jnp.sqrt(jnp.float32(D))
    weight = jax.random.uniform(k_w, (H, D), jnp.float32, -bound, bound)
    bias = jax.random.uniform(k_b, (H,), jnp.float32, -bound, bound)

    fwd = jax.jit(mlp_forward)
    out = fwd(y, xw, xt, weight, bias)
    out = jax.block_until_ready(out)

    # Reference check in plain JAX.
    combined = jnp.concatenate([y.reshape(B, -1), xt.reshape(B, -1)], axis=-1)
    ref = (combined @ weight.T + bias)[..., None]
    assert out.shape == (B, H, 1)
    assert jnp.allclose(out, ref, atol=1e-5, rtol=1e-5)

    print("KERNEL_OK")
</pallas_src>

<mosaic_0001>
module attributes {stable_mosaic.version = 11 : i64} {
  func.func @_mlp_kernel(%arg0: memref<4x8xf32, #tpu.memory_space<vmem>>, %arg1: memref<4x32xf32, #tpu.memory_space<vmem>>, %arg2: memref<8x40xf32, #tpu.memory_space<vmem>>, %arg3: memref<1x8xf32, #tpu.memory_space<vmem>>, %arg4: memref<4x128xf32, #tpu.memory_space<vmem>>) attributes {dimension_semantics = [], scalar_prefetch = 0 : i64, scratch_operands = 0 : i64, tpu.core_type = #tpu.core_type<tc>} {
    %c0 = arith.constant 0 : index
    %c0_0 = arith.constant 0 : index
    %0 = vector.load %arg0[%c0, %c0_0] : memref<4x8xf32, #tpu.memory_space<vmem>>, vector<4x8xf32>
    %c0_1 = arith.constant 0 : index
    %c0_2 = arith.constant 0 : index
    %1 = vector.load %arg1[%c0_1, %c0_2] : memref<4x32xf32, #tpu.memory_space<vmem>>, vector<4x32xf32>
    %c0_3 = arith.constant 0 : index
    %c0_4 = arith.constant 0 : index
    %2 = vector.load %arg2[%c0_3, %c0_4] : memref<8x40xf32, #tpu.memory_space<vmem>>, vector<8x40xf32>
    %3 = vector.extract_strided_slice %2 {offsets = [0, 0], sizes = [8, 8], strides = [1, 1]} : vector<8x40xf32> to vector<8x8xf32>
    %4 = vector.extract_strided_slice %2 {offsets = [0, 8], sizes = [8, 32], strides = [1, 1]} : vector<8x40xf32> to vector<8x32xf32>
    %cst = arith.constant dense<0.000000e+00> : vector<4x8xf32>
    %5 = tpu.matmul %0, %3, %cst {dimension_numbers = #tpu.dot_dimension_numbers<[1], [1], [0], [0], [0, 0, 1, 0], [], []>} : vector<4x8xf32>, vector<8x8xf32>, vector<4x8xf32> -> vector<4x8xf32>
    %cst_5 = arith.constant dense<0.000000e+00> : vector<4x8xf32>
    %6 = tpu.matmul %1, %4, %cst_5 {dimension_numbers = #tpu.dot_dimension_numbers<[1], [1], [0], [0], [0, 0, 1, 0], [], []>} : vector<4x32xf32>, vector<8x32xf32>, vector<4x8xf32> -> vector<4x8xf32>
    %7 = arith.addf %5, %6 : vector<4x8xf32>
    %c0_6 = arith.constant 0 : index
    %c0_7 = arith.constant 0 : index
    %8 = vector.load %arg3[%c0_6, %c0_7] : memref<1x8xf32, #tpu.memory_space<vmem>>, vector<1x8xf32>
    %9 = vector.broadcast %8 : vector<1x8xf32> to vector<4x8xf32>
    %10 = arith.addf %7, %9 : vector<4x8xf32>
    %c0_i32 = arith.constant 0 : i32
    %11 = arith.sitofp %c0_i32 : i32 to f32
    %12 = vector.broadcast %11 : f32 to vector<4x120xf32>
    %13 = tpu.concatenate %10, %12 in 1 : vector<4x8xf32>, vector<4x120xf32> -> vector<4x128xf32>
    %c0_8 = arith.constant 0 : index
    %c0_9 = arith.constant 0 : index
    %14 = vector.load %arg4[%c0_8, %c0_9] : memref<4x128xf32, #tpu.memory_space<vmem>>, vector<4x128xf32>
    tpu.vector_store %arg4[%c0_8, %c0_9], %13 {strides = array<i32>} : memref<4x128xf32, #tpu.memory_space<vmem>>, vector<4x128xf32>,
    return
  }
}

</mosaic_0001>

<llo_original>
// kernel: mlp_forward.1
$region0: #{mlp_forward.1}
  #allocation0 [shape = 'u32[]', space=smem, size = 0x4, offset = 0x4, fixed_abs, tag = 'smem constant byte address 0x4 - core index']
  #allocation1 [shape = 'u32[72,128]{1,0:T(1,128)}', space=vmem, size = 0x9000, scoped, tag = 'internal scratch']
  %s0 = inlined_call_operand.vmem [shape: f32[4,8], index: 0, kind: input, shape index: {}]
  %s1 = inlined_call_operand.vmem [shape: f32[4,32], index: 1, kind: input, shape index: {}]
  %s2 = inlined_call_operand.vmem [shape: f32[8,40], index: 2, kind: input, shape index: {}]
  %s3 = inlined_call_operand.vmem [shape: f32[1,8], index: 3, kind: input, shape index: {}]
  %s4 = inlined_call_operand.hbm [shape: f32[4,128], index: 4, kind: output, shape index: {}]
  %s5 = sld [smem:[#allocation0]]
  $region26: #{mlp_forward.1} parent=0
    _
  %s7 = ssub.s32 1, %s5
  %s8 = scalar_select 0, %s7, %s5
  $region1: #{mlp_forward.1} parent=0
    #allocation2 [shape = 'u8[2048]{0}', space=vmem, size = 0x800, scoped, tag = 'output window, operand 0, single buffered']
    #allocation3 [shape = 's32[1]{0}', space=sflag, size = 0x4, scoped, tag = 'scoped memory for mlp_forward.1']
    %9 = vsyncpa [#allocation3], 0
    // Predicated region
    $region2: #{mlp_forward.1} parent=1 // pred_check
      _
    $region3: #{mlp_forward.1} parent=1 // pred_check_branch
      %11 = sbr.rel (0) target = $region5
    $region4: #{mlp_forward.1} parent=1 // pred_region
      _
    $region5: #{mlp_forward.1} parent=1 // pred_fallthru
      _
    // Predicated region
    $region6: #{mlp_forward.1} parent=1 // pred_check
      _
    $region7: #{mlp_forward.1} parent=1 // pred_check_branch
      %13 = sbr.rel (0) target = $region9
    $region8: #{mlp_forward.1} parent=1 // pred_region
      _
    $region9: #{mlp_forward.1} parent=1 // pred_fallthru
      _
    // Predicated region
    $region10: #{mlp_forward.1} parent=1 // pred_check
      _
    $region11: #{mlp_forward.1} parent=1 // pred_check_branch
      %15 = sbr.rel (0) target = $region13
    $region12: #{mlp_forward.1} parent=1 // pred_region
      _
    $region13: #{mlp_forward.1} parent=1 // pred_fallthru
      _
    // Predicated region
    $region14: #{mlp_forward.1} parent=1 // pred_check
      _
    $region15: #{mlp_forward.1} parent=1 // pred_check_branch
      %17 = sbr.rel (0) target = $region17
    $region16: #{mlp_forward.1} parent=1 // pred_region
      _
    $region17: #{mlp_forward.1} parent=1 // pred_fallthru
      _
    %v18 = vld [vmem:[%s0] sm:$0xf]
    %v19 = vld [vmem:[%s1] sm:$0xf]
    %v20 = vld [vmem:[%s2] sm:$0xff]
    %22 = vrot.lane.b32.xlu0 %v20, 120
    %v23 = vpop.permute.xlu0 %22
    %vm24 = vcmask 261120
    %v26 = vsel %vm24, %v19, 0
    %v28 = vsel %vm24, %v23, 0
    %30 = vmatpush.xpose.msra.mxu0 0.0
    %31 = vmatpush.xpose.msra.mxu0 0.0
    %32 = vmatpush.xpose.msra.mxu0 0.0
    %33 = vmatpush.xpose.msra.mxu0 0.0
    %34 = vmatpush.xpose.msra.mxu0 0.0
    %35 = vmatpush.xpose.msra.mxu0 0.0
    %36 = vmatpush.xpose.msra.mxu0 0.0
    %37 = vmatpush.xpose.msra.mxu0 0.0
    %38 = vmatpush.xpose.msra.mxu0 0.0
    %39 = vmatpush.xpose.msra.mxu0 0.0
    %40 = vmatpush.xpose.msra.mxu0 0.0
    %41 = vmatpush.xpose.msra.mxu0 0.0
    %42 = vmatpush.xpose.msra.mxu0 0.0
    %43 = vmatpush.xpose.msra.mxu0 0.0
    %44 = vmatpush.xpose.msra.mxu0 0.0
    %45 = vmatpush.xpose.msra.mxu0 %v28
    %46 = vmatmul.f32.gmra.mxu0 %v26
    %v47 = vpop.f32.mrf.mxu0
    %v48 = vadd.f32 0.0, %v47
    %49 = vdwg.mxu0
    %vm50 = vcmask 64512
    %v52 = vsel %vm50, %v18, 0
    %v54 = vsel %vm50, %v20, 0
    %56 = vmatpush.xpose.msra.mxu0 0.0
    %57 = vmatpush.xpose.msra.mxu0 0.0
    %58 = vmatpush.xpose.msra.mxu0 0.0
    %59 = vmatpush.xpose.msra.mxu0 0.0
    %60 = vmatpush.xpose.msra.mxu0 0.0
    %61 = vmatpush.xpose.msra.mxu0 0.0
    %62 = vmatpush.xpose.msra.mxu0 0.0
    %63 = vmatpush.xpose.msra.mxu0 0.0
    %64 = vmatpush.xpose.msra.mxu0 0.0
    %65 = vmatpush.xpose.msra.mxu0 0.0
    %66 = vmatpush.xpose.msra.mxu0 0.0
    %67 = vmatpush.xpose.msra.mxu0 0.0
    %68 = vmatpush.xpose.msra.mxu0 0.0
    %69 = vmatpush.xpose.msra.mxu0 0.0
    %70 = vmatpush.xpose.msra.mxu0 0.0
    %71 = vmatpush.xpose.msra.mxu0 %v54
    %72 = vmatmul.f32.gmra.mxu0 %v52
    %v73 = vpop.f32.mrf.mxu0
    %v74 = vadd.f32 %v48, %v73
    %75 = vdwg.mxu0
    %v76 = vld [vmem:[%s3] sm:$0x1]
    %v78 = vperm.slane %v76, 0
    %v80 = vadd.f32 %v74, %v78
    %v81 = vsel %vm50, %v80, 0.0
    %82 = vst [vmem:[#allocation2] sm:$0xf] %v81
    // Predicated region
    $region18: #{mlp_forward.1} parent=1 // pred_check
      _
    $region19: #{mlp_forward.1} parent=1 // pred_check_branch
      %84 = sbr.rel (0) target = $region21
    $region20: #{mlp_forward.1} parent=1 // pred_region
      %86 = vsyncadd [#allocation3], 0
      %s88 = sshll.u32 [#allocation2], 4
      %s89 = int_to_ptr.vmem [resolvable:$true] %s88
      %s90 = sshll.u32 %s4, 4
      %s91 = int_to_ptr.hbm [resolvable:$true] %s90
      %93 = dma.vmem_to_hbm [thread:$0]  %s89, 64, %s91, [#allocation3]
    $region21: #{mlp_forward.1} parent=1 // pred_fallthru
      _
    // Predicated region
    $region22: #{mlp_forward.1} parent=1 // pred_check
      _
    $region23: #{mlp_forward.1} parent=1 // pred_check_branch
      %95 = sbr.rel (0) target = $region25
    $region24: #{mlp_forward.1} parent=1 // pred_region
      %97 = dma.done [#allocation3], 64
    $region25: #{mlp_forward.1} parent=1 // pred_fallthru
      _
    %98 = vsyncpa [#allocation3], 1

</llo_original>
